<compile_context>
chip_gen: v5e
topology: v5e:2x2
jax: 0.10.0
libtpu: 0.0.40
codegen_flags: <defaults>
</compile_context>

<pallas_src>
import functools

import jax
import jax.numpy as jnp
from jax.experimental import pallas as pl
from jax.experimental.pallas import tpu as pltpu

KSIZE = 7
PAD = KSIZE // 2
NUM_ACC = 4  # independent partial accumulators for the conv FMAs


def _tree_sum(terms):
    """Pairwise (tree) sum of a list of arrays -> short dependency chains."""
    terms = list(terms)
    while len(terms) > 1:
        nxt = [terms[i] + terms[i + 1] for i in range(0, len(terms) - 1, 2)]
        if len(terms) % 2:
            nxt.append(terms[-1])
        terms = nxt
    return terms[0]


def spatial_attention_kernel(x_ref, w_ref, o_ref, cpad_ref, rpad_ref, *, W):
    # x_ref:    (C, L)               one batch element, spatial flattened (L = H*W)
    # w_ref:    (KSIZE, 2*KSIZE)     conv weight, w_ref[kh, c*KSIZE + kw]
    # o_ref:    (1, L)               attention map (flattened, lane-dense store)
    # cpad_ref: (2, L + 2*PAD)       [avg, max] maps with PAD zero lanes each side
    # rpad_ref: (KSIZE, L + 2*PAD*W) per-kh partial rows, PAD*W zero lanes each side
    C, L = x_ref.shape
    PADW = PAD * W

    # ---- channel reduction (only the (1, L) results are cast to f32) -------
    x = x_ref[...]
    avg = jnp.mean(x, axis=0, keepdims=True).astype(jnp.float32)    # (1, L)
    mx = jnp.max(x, axis=0, keepdims=True).astype(jnp.float32)      # (1, L)

    # ---- stage A scratch: zero only the PAD-wide halos, write interiors ----
    cpad_ref[:, 0:PAD] = jnp.zeros((2, PAD), jnp.float32)
    cpad_ref[:, PAD + L:2 * PAD + L] = jnp.zeros((2, PAD), jnp.float32)
    cpad_ref[0:1, PAD:PAD + L] = avg
    cpad_ref[1:2, PAD:PAD + L] = mx

    # Column index within each spatial row (masks cross-row wrap of kw taps).
    wpos = jax.lax.broadcasted_iota(jnp.int32, (1, L), 1) % W

    w_full = w_ref[...]                                              # (KSIZE, 2*KSIZE)

    # ---- stage A: 14 lane-shifted column taps -> (KSIZE, L) per-kh rows ----
    accs = [jnp.zeros((KSIZE, L), jnp.float32) for _ in range(NUM_ACC)]
    t = 0
    for c in range(2):
        for kw in range(KSIZE):
            col = cpad_ref[c:c + 1, kw:kw + L]                       # (1, L): shift by kw-PAD
            if kw != PAD:                                            # kill cross-row wrap
                valid = (wpos >= PAD - kw) & (wpos < W + PAD - kw)
                col = jnp.where(valid, col, 0.0)
            j = c * KSIZE + kw
            wcol = w_full[:, j:j + 1]                                # (KSIZE, 1): all kh weights
            accs[t % NUM_ACC] = accs[t % NUM_ACC] + wcol * col       # (KSIZE, L) FMA
            t += 1
    row_acc = _tree_sum(accs)                                        # (KSIZE, L)

    # ---- stage B: the 7 kh (row) shifts via a PAD*W-lane padded scratch ----
    rpad_ref[:, 0:PADW] = jnp.zeros((KSIZE, PADW), jnp.float32)
    rpad_ref[:, PADW + L:2 * PADW + L] = jnp.zeros((KSIZE, PADW), jnp.float32)
    rpad_ref[:, PADW:PADW + L] = row_acc
    parts = [rpad_ref[kh:kh + 1, kh * W:kh * W + L] for kh in range(KSIZE)]
    conv = _tree_sum(parts)                                          # (1, L)

    o_ref[...] = jax.nn.sigmoid(conv).astype(o_ref.dtype)


def spatial_attention(x, weight):
    """x: (N, C, H, W).  weight: (1, 2, KSIZE, KSIZE) from nn.Conv2d(2,1,7,bias=False)."""
    N, C, H, W = x.shape
    L = H * W
    x_flat = x.reshape(N, C, L)                          # contiguous reshape, free
    # w2[kh, c*KSIZE + kw] = weight[0, c, kh, kw]
    w2 = jnp.transpose(weight.reshape(2, KSIZE, KSIZE), (1, 0, 2))
    w2 = w2.reshape(KSIZE, 2 * KSIZE).astype(jnp.float32)

    kernel = functools.partial(spatial_attention_kernel, W=W)
    out_flat = pl.pallas_call(
        kernel,
        out_shape=jax.ShapeDtypeStruct((N, 1, L), x.dtype),
        grid=(N,),
        in_specs=[
            pl.BlockSpec((pl.Squeezed(), C, L), lambda n: (n, 0, 0)),
            pl.BlockSpec((KSIZE, 2 * KSIZE), lambda n: (0, 0)),
        ],
        out_specs=pl.BlockSpec((pl.Squeezed(), 1, L), lambda n: (n, 0, 0)),
        scratch_shapes=[
            pltpu.VMEM((2, L + 2 * PAD), jnp.float32),
            pltpu.VMEM((KSIZE, L + 2 * PAD * W), jnp.float32),
        ],
        compiler_params=pltpu.CompilerParams(
            dimension_semantics=("parallel",)),
    )(x_flat, w2)
    return out_flat.reshape(N, 1, H, W)


def spatial_attention_ref(x, weight):
    """Pure-JAX reference matching the PyTorch forward."""
    avg = jnp.mean(x, axis=1, keepdims=True)
    mx = jnp.max(x, axis=1, keepdims=True)
    cat = jnp.concatenate([avg, mx], axis=1)             # (N, 2, H, W)
    out = jax.lax.conv_general_dilated(
        cat, weight, window_strides=(1, 1),
        padding=[(PAD, PAD), (PAD, PAD)],
        dimension_numbers=("NCHW", "OIHW", "NCHW"),
        precision=jax.lax.Precision.HIGHEST)
    return jax.nn.sigmoid(out)


if __name__ == "__main__":
    key = jax.random.PRNGKey(0)
    kx, kw_key = jax.random.split(key)

    N, C, H, W = 2, 4, 16, 16
    x = jax.random.normal(kx, (N, C, H, W), dtype=jnp.float32)
    # Deterministic conv weight (shape from nn.Conv2d(2, 1, 7, bias=False)).
    weight = 0.1 * jax.random.normal(kw_key, (1, 2, KSIZE, KSIZE), dtype=jnp.float32)

    out = spatial_attention(x, weight)
    out = jax.block_until_ready(out)

    ref = spatial_attention_ref(x, weight)
    assert out.shape == (N, 1, H, W)
    err = jnp.max(jnp.abs(out - ref))
    assert jnp.allclose(out, ref, atol=5e-5, rtol=1e-5), f"max err {err}"

    print("KERNEL_OK")
</pallas_src>

<mosaic_0001>
module attributes {stable_mosaic.version = 11 : i64} {
  func.func @spatial_attention_kernel(%arg0: i32, %arg1: memref<1x4x256xf32, #tpu.memory_space<vmem>>, %arg2: memref<7x14xf32, #tpu.memory_space<vmem>>, %arg3: memref<1x1x256xf32, #tpu.memory_space<vmem>>, %arg4: memref<2x262xf32, #tpu.memory_space<vmem>>, %arg5: memref<7x352xf32, #tpu.memory_space<vmem>>) attributes {dimension_semantics = [#tpu.dimension_semantics<parallel>], iteration_bounds = array<i64: 2>, scalar_prefetch = 0 : i64, scratch_operands = 2 : i64, tpu.core_type = #tpu.core_type<tc>, window_params = [{transform_indices = @transform_0, window_bounds = array<i64: 1, 4, 256>}, {pipeline_mode = #tpu.pipeline_mode<synchronous>, transform_indices = @transform_1, window_bounds = array<i64: 7, 14>}, {transform_indices = @transform_2, window_bounds = array<i64: 1, 1, 256>}]} {
    %c0 = arith.constant 0 : index
    %c0_0 = arith.constant 0 : index
    %c0_1 = arith.constant 0 : index
    %0 = vector.load %arg1[%c0, %c0_0, %c0_1] : memref<1x4x256xf32, #tpu.memory_space<vmem>>, vector<1x4x256xf32>
    %1 = vector.shape_cast %0 : vector<1x4x256xf32> to vector<4x256xf32>
    %cst = arith.constant dense<0.000000e+00> : vector<256xf32>
    %2 = vector.multi_reduction <add>, %1, %cst [0] : vector<4x256xf32> to vector<256xf32>
    %3 = vector.shape_cast %2 : vector<256xf32> to vector<1x256xf32>
    %cst_2 = arith.constant 4.000000e+00 : f32
    %4 = vector.broadcast %cst_2 : f32 to vector<1x256xf32>
    %5 = arith.divf %3, %4 : vector<1x256xf32>
    %cst_3 = arith.constant dense<0xFF800000> : vector<256xf32>
    %6 = vector.multi_reduction <maximumf>, %1, %cst_3 [0] : vector<4x256xf32> to vector<256xf32>
    %7 = vector.shape_cast %6 : vector<256xf32> to vector<1x256xf32>
    %cst_4 = arith.constant 0.000000e+00 : f32
    %8 = vector.broadcast %cst_4 : f32 to vector<2x3xf32>
    %c0_5 = arith.constant 0 : index
    %c0_6 = arith.constant 0 : index
    %9 = vector.load %arg4[%c0_5, %c0_6] : memref<2x262xf32, #tpu.memory_space<vmem>>, vector<2x3xf32>
    tpu.vector_store %arg4[%c0_5, %c0_6], %8 {strides = array<i32>} : memref<2x262xf32, #tpu.memory_space<vmem>>, vector<2x3xf32>,
    %cst_7 = arith.constant 0.000000e+00 : f32
    %10 = vector.broadcast %cst_7 : f32 to vector<2x3xf32>
    %c0_8 = arith.constant 0 : index
    %c259 = arith.constant 259 : index
    %11 = vector.load %arg4[%c0_8, %c259] : memref<2x262xf32, #tpu.memory_space<vmem>>, vector<2x3xf32>
    tpu.vector_store %arg4[%c0_8, %c259], %10 {strides = array<i32>} : memref<2x262xf32, #tpu.memory_space<vmem>>, vector<2x3xf32>,
    %c0_9 = arith.constant 0 : index
    %c3 = arith.constant 3 : index
    %12 = vector.load %arg4[%c0_9, %c3] : memref<2x262xf32, #tpu.memory_space<vmem>>, vector<1x256xf32>
    tpu.vector_store %arg4[%c0_9, %c3], %5 {strides = array<i32>} : memref<2x262xf32, #tpu.memory_space<vmem>>, vector<1x256xf32>,
    %c1 = arith.constant 1 : index
    %c3_10 = arith.constant 3 : index
    %13 = vector.load %arg4[%c1, %c3_10] : memref<2x262xf32, #tpu.memory_space<vmem>>, vector<1x256xf32>
    tpu.vector_store %arg4[%c1, %c3_10], %7 {strides = array<i32>} : memref<2x262xf32, #tpu.memory_space<vmem>>, vector<1x256xf32>,
    %14 = tpu.iota {dimensions = array<i32: 1>} : vector<1x256xi32>
    %c16_i32 = arith.constant 16 : i32
    %c0_i32 = arith.constant 0 : i32
    %15 = arith.cmpi eq, %c16_i32, %c0_i32 : i32
    %c1_i32 = arith.constant 1 : i32
    %16 = arith.select %15, %c1_i32, %c16_i32 : i32
    %17 = vector.broadcast %16 : i32 to vector<1x256xi32>
    %18 = arith.remsi %14, %17 : vector<1x256xi32>
    %c0_i32_11 = arith.constant 0 : i32
    %19 = vector.broadcast %c0_i32_11 : i32 to vector<1x256xi32>
    %20 = arith.cmpi ne, %18, %19 : vector<1x256xi32>
    %c0_i32_12 = arith.constant 0 : i32
    %21 = vector.broadcast %c0_i32_12 : i32 to vector<1x256xi32>
    %22 = arith.cmpi slt, %18, %21 : vector<1x256xi32>
    %c0_i32_13 = arith.constant 0 : i32
    %23 = arith.cmpi slt, %16, %c0_i32_13 : i32
    %24 = vector.broadcast %23 : i1 to vector<1x256xi1>
    %25 = vector.broadcast %24 : vector<1x256xi1> to vector<1x256xi1>
    %26 = arith.xori %22, %25 : vector<1x256xi1>
    %27 = arith.andi %26, %20 : vector<1x256xi1>
    %28 = vector.broadcast %16 : i32 to vector<1x256xi32>
    %29 = arith.addi %18, %28 : vector<1x256xi32>
    %30 = arith.select %27, %29, %18 : vector<1x256xi1>, vector<1x256xi32>
    %c0_14 = arith.constant 0 : index
    %c0_15 = arith.constant 0 : index
    %31 = vector.load %arg2[%c0_14, %c0_15] : memref<7x14xf32, #tpu.memory_space<vmem>>, vector<7x14xf32>
    %cst_16 = arith.constant 0.000000e+00 : f32
    %32 = vector.broadcast %cst_16 : f32 to vector<7x256xf32>
    %cst_17 = arith.constant 0.000000e+00 : f32
    %33 = vector.broadcast %cst_17 : f32 to vector<7x256xf32>
    %cst_18 = arith.constant 0.000000e+00 : f32
    %34 = vector.broadcast %cst_18 : f32 to vector<7x256xf32>
    %cst_19 = arith.constant 0.000000e+00 : f32
    %35 = vector.broadcast %cst_19 : f32 to vector<7x256xf32>
    %c0_20 = arith.constant 0 : index
    %c0_21 = arith.constant 0 : index
    %36 = vector.load %arg4[%c0_20, %c0_21] : memref<2x262xf32, #tpu.memory_space<vmem>>, vector<1x256xf32>
    %c3_i32 = arith.constant 3 : i32
    %37 = vector.broadcast %c3_i32 : i32 to vector<1x256xi32>
    %38 = arith.cmpi sge, %30, %37 : vector<1x256xi32>
    %c19_i32 = arith.constant 19 : i32
    %39 = vector.broadcast %c19_i32 : i32 to vector<1x256xi32>
    %40 = arith.cmpi slt, %30, %39 : vector<1x256xi32>
    %41 = arith.andi %38, %40 : vector<1x256xi1>
    %cst_22 = arith.constant 0.000000e+00 : f32
    %42 = vector.broadcast %cst_22 : f32 to vector<1x256xf32>
    %43 = arith.select %41, %36, %42 : vector<1x256xi1>, vector<1x256xf32>
    %44 = vector.extract_strided_slice %31 {offsets = [0, 0], sizes = [7, 1], strides = [1, 1]} : vector<7x14xf32> to vector<7x1xf32>
    %45 = vector.broadcast %44 : vector<7x1xf32> to vector<7x256xf32>
    %46 = vector.broadcast %43 : vector<1x256xf32> to vector<7x256xf32>
    %47 = arith.mulf %45, %46 : vector<7x256xf32>
    %48 = arith.addf %32, %47 : vector<7x256xf32>
    %c0_23 = arith.constant 0 : index
    %c1_24 = arith.constant 1 : index
    %49 = vector.load %arg4[%c0_23, %c1_24] : memref<2x262xf32, #tpu.memory_space<vmem>>, vector<1x256xf32>
    %c2_i32 = arith.constant 2 : i32
    %50 = vector.broadcast %c2_i32 : i32 to vector<1x256xi32>
    %51 = arith.cmpi sge, %30, %50 : vector<1x256xi32>
    %c18_i32 = arith.constant 18 : i32
    %52 = vector.broadcast %c18_i32 : i32 to vector<1x256xi32>
    %53 = arith.cmpi slt, %30, %52 : vector<1x256xi32>
    %54 = arith.andi %51, %53 : vector<1x256xi1>
    %cst_25 = arith.constant 0.000000e+00 : f32
    %55 = vector.broadcast %cst_25 : f32 to vector<1x256xf32>
    %56 = arith.select %54, %49, %55 : vector<1x256xi1>, vector<1x256xf32>
    %57 = vector.extract_strided_slice %31 {offsets = [0, 1], sizes = [7, 1], strides = [1, 1]} : vector<7x14xf32> to vector<7x1xf32>
    %58 = vector.broadcast %57 : vector<7x1xf32> to vector<7x256xf32>
    %59 = vector.broadcast %56 : vector<1x256xf32> to vector<7x256xf32>
    %60 = arith.mulf %58, %59 : vector<7x256xf32>
    %61 = arith.addf %33, %60 : vector<7x256xf32>
    %c0_26 = arith.constant 0 : index
    %c2 = arith.constant 2 : index
    %62 = vector.load %arg4[%c0_26, %c2] : memref<2x262xf32, #tpu.memory_space<vmem>>, vector<1x256xf32>
    %c1_i32_27 = arith.constant 1 : i32
    %63 = vector.broadcast %c1_i32_27 : i32 to vector<1x256xi32>
    %64 = arith.cmpi sge, %30, %63 : vector<1x256xi32>
    %c17_i32 = arith.constant 17 : i32
    %65 = vector.broadcast %c17_i32 : i32 to vector<1x256xi32>
    %66 = arith.cmpi slt, %30, %65 : vector<1x256xi32>
    %67 = arith.andi %64, %66 : vector<1x256xi1>
    %cst_28 = arith.constant 0.000000e+00 : f32
    %68 = vector.broadcast %cst_28 : f32 to vector<1x256xf32>
    %69 = arith.select %67, %62, %68 : vector<1x256xi1>, vector<1x256xf32>
    %70 = vector.extract_strided_slice %31 {offsets = [0, 2], sizes = [7, 1], strides = [1, 1]} : vector<7x14xf32> to vector<7x1xf32>
    %71 = vector.broadcast %70 : vector<7x1xf32> to vector<7x256xf32>
    %72 = vector.broadcast %69 : vector<1x256xf32> to vector<7x256xf32>
    %73 = arith.mulf %71, %72 : vector<7x256xf32>
    %74 = arith.addf %34, %73 : vector<7x256xf32>
    %c0_29 = arith.constant 0 : index
    %c3_30 = arith.constant 3 : index
    %75 = vector.load %arg4[%c0_29, %c3_30] : memref<2x262xf32, #tpu.memory_space<vmem>>, vector<1x256xf32>
    %76 = vector.extract_strided_slice %31 {offsets = [0, 3], sizes = [7, 1], strides = [1, 1]} : vector<7x14xf32> to vector<7x1xf32>
    %77 = vector.broadcast %76 : vector<7x1xf32> to vector<7x256xf32>
    %78 = vector.broadcast %75 : vector<1x256xf32> to vector<7x256xf32>
    %79 = arith.mulf %77, %78 : vector<7x256xf32>
    %80 = arith.addf %35, %79 : vector<7x256xf32>
    %c0_31 = arith.constant 0 : index
    %c4 = arith.constant 4 : index
    %81 = vector.load %arg4[%c0_31, %c4] : memref<2x262xf32, #tpu.memory_space<vmem>>, vector<1x256xf32>
    %c-1_i32 = arith.constant -1 : i32
    %82 = vector.broadcast %c-1_i32 : i32 to vector<1x256xi32>
    %83 = arith.cmpi sge, %30, %82 : vector<1x256xi32>
    %c15_i32 = arith.constant 15 : i32
    %84 = vector.broadcast %c15_i32 : i32 to vector<1x256xi32>
    %85 = arith.cmpi slt, %30, %84 : vector<1x256xi32>
    %86 = arith.andi %83, %85 : vector<1x256xi1>
    %cst_32 = arith.constant 0.000000e+00 : f32
    %87 = vector.broadcast %cst_32 : f32 to vector<1x256xf32>
    %88 = arith.select %86, %81, %87 : vector<1x256xi1>, vector<1x256xf32>
    %89 = vector.extract_strided_slice %31 {offsets = [0, 4], sizes = [7, 1], strides = [1, 1]} : vector<7x14xf32> to vector<7x1xf32>
    %90 = vector.broadcast %89 : vector<7x1xf32> to vector<7x256xf32>
    %91 = vector.broadcast %88 : vector<1x256xf32> to vector<7x256xf32>
    %92 = arith.mulf %90, %91 : vector<7x256xf32>
    %93 = arith.addf %48, %92 : vector<7x256xf32>
    %c0_33 = arith.constant 0 : index
    %c5 = arith.constant 5 : index
    %94 = vector.load %arg4[%c0_33, %c5] : memref<2x262xf32, #tpu.memory_space<vmem>>, vector<1x256xf32>
    %c-2_i32 = arith.constant -2 : i32
    %95 = vector.broadcast %c-2_i32 : i32 to vector<1x256xi32>
    %96 = arith.cmpi sge, %30, %95 : vector<1x256xi32>
    %c14_i32 = arith.constant 14 : i32
    %97 = vector.broadcast %c14_i32 : i32 to vector<1x256xi32>
    %98 = arith.cmpi slt, %30, %97 : vector<1x256xi32>
    %99 = arith.andi %96, %98 : vector<1x256xi1>
    %cst_34 = arith.constant 0.000000e+00 : f32
    %100 = vector.broadcast %cst_34 : f32 to vector<1x256xf32>
    %101 = arith.select %99, %94, %100 : vector<1x256xi1>, vector<1x256xf32>
    %102 = vector.extract_strided_slice %31 {offsets = [0, 5], sizes = [7, 1], strides = [1, 1]} : vector<7x14xf32> to vector<7x1xf32>
    %103 = vector.broadcast %102 : vector<7x1xf32> to vector<7x256xf32>
    %104 = vector.broadcast %101 : vector<1x256xf32> to vector<7x256xf32>
    %105 = arith.mulf %103, %104 : vector<7x256xf32>
    %106 = arith.addf %61, %105 : vector<7x256xf32>
    %c0_35 = arith.constant 0 : index
    %c6 = arith.constant 6 : index
    %107 = vector.load %arg4[%c0_35, %c6] : memref<2x262xf32, #tpu.memory_space<vmem>>, vector<1x256xf32>
    %c-3_i32 = arith.constant -3 : i32
    %108 = vector.broadcast %c-3_i32 : i32 to vector<1x256xi32>
    %109 = arith.cmpi sge, %30, %108 : vector<1x256xi32>
    %c13_i32 = arith.constant 13 : i32
    %110 = vector.broadcast %c13_i32 : i32 to vector<1x256xi32>
    %111 = arith.cmpi slt, %30, %110 : vector<1x256xi32>
    %112 = arith.andi %109, %111 : vector<1x256xi1>
    %cst_36 = arith.constant 0.000000e+00 : f32
    %113 = vector.broadcast %cst_36 : f32 to vector<1x256xf32>
    %114 = arith.select %112, %107, %113 : vector<1x256xi1>, vector<1x256xf32>
    %115 = vector.extract_strided_slice %31 {offsets = [0, 6], sizes = [7, 1], strides = [1, 1]} : vector<7x14xf32> to vector<7x1xf32>
    %116 = vector.broadcast %115 : vector<7x1xf32> to vector<7x256xf32>
    %117 = vector.broadcast %114 : vector<1x256xf32> to vector<7x256xf32>
    %118 = arith.mulf %116, %117 : vector<7x256xf32>
    %119 = arith.addf %74, %118 : vector<7x256xf32>
    %c1_37 = arith.constant 1 : index
    %c0_38 = arith.constant 0 : index
    %120 = vector.load %arg4[%c1_37, %c0_38] : memref<2x262xf32, #tpu.memory_space<vmem>>, vector<1x256xf32>
    %c3_i32_39 = arith.constant 3 : i32
    %121 = vector.broadcast %c3_i32_39 : i32 to vector<1x256xi32>
    %122 = arith.cmpi sge, %30, %121 : vector<1x256xi32>
    %c19_i32_40 = arith.constant 19 : i32
    %123 = vector.broadcast %c19_i32_40 : i32 to vector<1x256xi32>
    %124 = arith.cmpi slt, %30, %123 : vector<1x256xi32>
    %125 = arith.andi %122, %124 : vector<1x256xi1>
    %cst_41 = arith.constant 0.000000e+00 : f32
    %126 = vector.broadcast %cst_41 : f32 to vector<1x256xf32>
    %127 = arith.select %125, %120, %126 : vector<1x256xi1>, vector<1x256xf32>
    %128 = vector.extract_strided_slice %31 {offsets = [0, 7], sizes = [7, 1], strides = [1, 1]} : vector<7x14xf32> to vector<7x1xf32>
    %129 = vector.broadcast %128 : vector<7x1xf32> to vector<7x256xf32>
    %130 = vector.broadcast %127 : vector<1x256xf32> to vector<7x256xf32>
    %131 = arith.mulf %129, %130 : vector<7x256xf32>
    %132 = arith.addf %80, %131 : vector<7x256xf32>
    %c1_42 = arith.constant 1 : index
    %c1_43 = arith.constant 1 : index
    %133 = vector.load %arg4[%c1_42, %c1_43] : memref<2x262xf32, #tpu.memory_space<vmem>>, vector<1x256xf32>
    %c2_i32_44 = arith.constant 2 : i32
    %134 = vector.broadcast %c2_i32_44 : i32 to vector<1x256xi32>
    %135 = arith.cmpi sge, %30, %134 : vector<1x256xi32>
    %c18_i32_45 = arith.constant 18 : i32
    %136 = vector.broadcast %c18_i32_45 : i32 to vector<1x256xi32>
    %137 = arith.cmpi slt, %30, %136 : vector<1x256xi32>
    %138 = arith.andi %135, %137 : vector<1x256xi1>
    %cst_46 = arith.constant 0.000000e+00 : f32
    %139 = vector.broadcast %cst_46 : f32 to vector<1x256xf32>
    %140 = arith.select %138, %133, %139 : vector<1x256xi1>, vector<1x256xf32>
    %141 = vector.extract_strided_slice %31 {offsets = [0, 8], sizes = [7, 1], strides = [1, 1]} : vector<7x14xf32> to vector<7x1xf32>
    %142 = vector.broadcast %141 : vector<7x1xf32> to vector<7x256xf32>
    %143 = vector.broadcast %140 : vector<1x256xf32> to vector<7x256xf32>
    %144 = arith.mulf %142, %143 : vector<7x256xf32>
    %145 = arith.addf %93, %144 : vector<7x256xf32>
    %c1_47 = arith.constant 1 : index
    %c2_48 = arith.constant 2 : index
    %146 = vector.load %arg4[%c1_47, %c2_48] : memref<2x262xf32, #tpu.memory_space<vmem>>, vector<1x256xf32>
    %c1_i32_49 = arith.constant 1 : i32
    %147 = vector.broadcast %c1_i32_49 : i32 to vector<1x256xi32>
    %148 = arith.cmpi sge, %30, %147 : vector<1x256xi32>
    %c17_i32_50 = arith.constant 17 : i32
    %149 = vector.broadcast %c17_i32_50 : i32 to vector<1x256xi32>
    %150 = arith.cmpi slt, %30, %149 : vector<1x256xi32>
    %151 = arith.andi %148, %150 : vector<1x256xi1>
    %cst_51 = arith.constant 0.000000e+00 : f32
    %152 = vector.broadcast %cst_51 : f32 to vector<1x256xf32>
    %153 = arith.select %151, %146, %152 : vector<1x256xi1>, vector<1x256xf32>
    %154 = vector.extract_strided_slice %31 {offsets = [0, 9], sizes = [7, 1], strides = [1, 1]} : vector<7x14xf32> to vector<7x1xf32>
    %155 = vector.broadcast %154 : vector<7x1xf32> to vector<7x256xf32>
    %156 = vector.broadcast %153 : vector<1x256xf32> to vector<7x256xf32>
    %157 = arith.mulf %155, %156 : vector<7x256xf32>
    %158 = arith.addf %106, %157 : vector<7x256xf32>
    %c1_52 = arith.constant 1 : index
    %c3_53 = arith.constant 3 : index
    %159 = vector.load %arg4[%c1_52, %c3_53] : memref<2x262xf32, #tpu.memory_space<vmem>>, vector<1x256xf32>
    %160 = vector.extract_strided_slice %31 {offsets = [0, 10], sizes = [7, 1], strides = [1, 1]} : vector<7x14xf32> to vector<7x1xf32>
    %161 = vector.broadcast %160 : vector<7x1xf32> to vector<7x256xf32>
    %162 = vector.broadcast %159 : vector<1x256xf32> to vector<7x256xf32>
    %163 = arith.mulf %161, %162 : vector<7x256xf32>
    %164 = arith.addf %119, %163 : vector<7x256xf32>
    %c1_54 = arith.constant 1 : index
    %c4_55 = arith.constant 4 : index
    %165 = vector.load %arg4[%c1_54, %c4_55] : memref<2x262xf32, #tpu.memory_space<vmem>>, vector<1x256xf32>
    %c-1_i32_56 = arith.constant -1 : i32
    %166 = vector.broadcast %c-1_i32_56 : i32 to vector<1x256xi32>
    %167 = arith.cmpi sge, %30, %166 : vector<1x256xi32>
    %c15_i32_57 = arith.constant 15 : i32
    %168 = vector.broadcast %c15_i32_57 : i32 to vector<1x256xi32>
    %169 = arith.cmpi slt, %30, %168 : vector<1x256xi32>
    %170 = arith.andi %167, %169 : vector<1x256xi1>
    %cst_58 = arith.constant 0.000000e+00 : f32
    %171 = vector.broadcast %cst_58 : f32 to vector<1x256xf32>
    %172 = arith.select %170, %165, %171 : vector<1x256xi1>, vector<1x256xf32>
    %173 = vector.extract_strided_slice %31 {offsets = [0, 11], sizes = [7, 1], strides = [1, 1]} : vector<7x14xf32> to vector<7x1xf32>
    %174 = vector.broadcast %173 : vector<7x1xf32> to vector<7x256xf32>
    %175 = vector.broadcast %172 : vector<1x256xf32> to vector<7x256xf32>
    %176 = arith.mulf %174, %175 : vector<7x256xf32>
    %177 = arith.addf %132, %176 : vector<7x256xf32>
    %c1_59 = arith.constant 1 : index
    %c5_60 = arith.constant 5 : index
    %178 = vector.load %arg4[%c1_59, %c5_60] : memref<2x262xf32, #tpu.memory_space<vmem>>, vector<1x256xf32>
    %c-2_i32_61 = arith.constant -2 : i32
    %179 = vector.broadcast %c-2_i32_61 : i32 to vector<1x256xi32>
    %180 = arith.cmpi sge, %30, %179 : vector<1x256xi32>
    %c14_i32_62 = arith.constant 14 : i32
    %181 = vector.broadcast %c14_i32_62 : i32 to vector<1x256xi32>
    %182 = arith.cmpi slt, %30, %181 : vector<1x256xi32>
    %183 = arith.andi %180, %182 : vector<1x256xi1>
    %cst_63 = arith.constant 0.000000e+00 : f32
    %184 = vector.broadcast %cst_63 : f32 to vector<1x256xf32>
    %185 = arith.select %183, %178, %184 : vector<1x256xi1>, vector<1x256xf32>
    %186 = vector.extract_strided_slice %31 {offsets = [0, 12], sizes = [7, 1], strides = [1, 1]} : vector<7x14xf32> to vector<7x1xf32>
    %187 = vector.broadcast %186 : vector<7x1xf32> to vector<7x256xf32>
    %188 = vector.broadcast %185 : vector<1x256xf32> to vector<7x256xf32>
    %189 = arith.mulf %187, %188 : vector<7x256xf32>
    %190 = arith.addf %145, %189 : vector<7x256xf32>
    %c1_64 = arith.constant 1 : index
    %c6_65 = arith.constant 6 : index
    %191 = vector.load %arg4[%c1_64, %c6_65] : memref<2x262xf32, #tpu.memory_space<vmem>>, vector<1x256xf32>
    %c-3_i32_66 = arith.constant -3 : i32
    %192 = vector.broadcast %c-3_i32_66 : i32 to vector<1x256xi32>
    %193 = arith.cmpi sge, %30, %192 : vector<1x256xi32>
    %c13_i32_67 = arith.constant 13 : i32
    %194 = vector.broadcast %c13_i32_67 : i32 to vector<1x256xi32>
    %195 = arith.cmpi slt, %30, %194 : vector<1x256xi32>
    %196 = arith.andi %193, %195 : vector<1x256xi1>
    %cst_68 = arith.constant 0.000000e+00 : f32
    %197 = vector.broadcast %cst_68 : f32 to vector<1x256xf32>
    %198 = arith.select %196, %191, %197 : vector<1x256xi1>, vector<1x256xf32>
    %199 = vector.extract_strided_slice %31 {offsets = [0, 13], sizes = [7, 1], strides = [1, 1]} : vector<7x14xf32> to vector<7x1xf32>
    %200 = vector.broadcast %199 : vector<7x1xf32> to vector<7x256xf32>
    %201 = vector.broadcast %198 : vector<1x256xf32> to vector<7x256xf32>
    %202 = arith.mulf %200, %201 : vector<7x256xf32>
    %203 = arith.addf %158, %202 : vector<7x256xf32>
    %204 = arith.addf %190, %203 : vector<7x256xf32>
    %205 = arith.addf %164, %177 : vector<7x256xf32>
    %206 = arith.addf %204, %205 : vector<7x256xf32>
    %cst_69 = arith.constant 0.000000e+00 : f32
    %207 = vector.broadcast %cst_69 : f32 to vector<7x48xf32>
    %c0_70 = arith.constant 0 : index
    %c0_71 = arith.constant 0 : index
    %208 = vector.load %arg5[%c0_70, %c0_71] : memref<7x352xf32, #tpu.memory_space<vmem>>, vector<7x48xf32>
    tpu.vector_store %arg5[%c0_70, %c0_71], %207 {strides = array<i32>} : memref<7x352xf32, #tpu.memory_space<vmem>>, vector<7x48xf32>,
    %cst_72 = arith.constant 0.000000e+00 : f32
    %209 = vector.broadcast %cst_72 : f32 to vector<7x48xf32>
    %c0_73 = arith.constant 0 : index
    %c304 = arith.constant 304 : index
    %210 = vector.load %arg5[%c0_73, %c304] : memref<7x352xf32, #tpu.memory_space<vmem>>, vector<7x48xf32>
    tpu.vector_store %arg5[%c0_73, %c304], %209 {strides = array<i32>} : memref<7x352xf32, #tpu.memory_space<vmem>>, vector<7x48xf32>,
    %c0_74 = arith.constant 0 : index
    %c48 = arith.constant 48 : index
    %211 = vector.load %arg5[%c0_74, %c48] : memref<7x352xf32, #tpu.memory_space<vmem>>, vector<7x256xf32>
    tpu.vector_store %arg5[%c0_74, %c48], %206 {strides = array<i32>} : memref<7x352xf32, #tpu.memory_space<vmem>>, vector<7x256xf32>,
    %c0_75 = arith.constant 0 : index
    %c0_76 = arith.constant 0 : index
    %212 = vector.load %arg5[%c0_75, %c0_76] : memref<7x352xf32, #tpu.memory_space<vmem>>, vector<1x256xf32>
    %c1_77 = arith.constant 1 : index
    %c16 = arith.constant 16 : index
    %213 = vector.load %arg5[%c1_77, %c16] : memref<7x352xf32, #tpu.memory_space<vmem>>, vector<1x256xf32>
    %c2_78 = arith.constant 2 : index
    %c32 = arith.constant 32 : index
    %214 = vector.load %arg5[%c2_78, %c32] : memref<7x352xf32, #tpu.memory_space<vmem>>, vector<1x256xf32>
    %c3_79 = arith.constant 3 : index
    %c48_80 = arith.constant 48 : index
    %215 = vector.load %arg5[%c3_79, %c48_80] : memref<7x352xf32, #tpu.memory_space<vmem>>, vector<1x256xf32>
    %c4_81 = arith.constant 4 : index
    %c64 = arith.constant 64 : index
    %216 = vector.load %arg5[%c4_81, %c64] : memref<7x352xf32, #tpu.memory_space<vmem>>, vector<1x256xf32>
    %c5_82 = arith.constant 5 : index
    %c80 = arith.constant 80 : index
    %217 = vector.load %arg5[%c5_82, %c80] : memref<7x352xf32, #tpu.memory_space<vmem>>, vector<1x256xf32>
    %c6_83 = arith.constant 6 : index
    %c96 = arith.constant 96 : index
    %218 = vector.load %arg5[%c6_83, %c96] : memref<7x352xf32, #tpu.memory_space<vmem>>, vector<1x256xf32>
    %219 = arith.addf %212, %213 : vector<1x256xf32>
    %220 = arith.addf %214, %215 : vector<1x256xf32>
    %221 = arith.addf %216, %217 : vector<1x256xf32>
    %222 = arith.addf %219, %220 : vector<1x256xf32>
    %223 = arith.addf %221, %218 : vector<1x256xf32>
    %224 = arith.addf %222, %223 : vector<1x256xf32>
    %225 = arith.negf %224 : vector<1x256xf32>
    %226 = math.exp %225 : vector<1x256xf32>
    %cst_84 = arith.constant 1.000000e+00 : f32
    %227 = vector.broadcast %cst_84 : f32 to vector<1x256xf32>
    %228 = arith.addf %227, %226 : vector<1x256xf32>
    %229 = arith.divf %227, %228 : vector<1x256xf32>
    %c0_85 = arith.constant 0 : index
    %c0_86 = arith.constant 0 : index
    %c0_87 = arith.constant 0 : index
    %230 = vector.load %arg3[%c0_85, %c0_86, %c0_87] : memref<1x1x256xf32, #tpu.memory_space<vmem>>, vector<1x1x256xf32>
    %231 = vector.shape_cast %230 : vector<1x1x256xf32> to vector<1x256xf32>
    %232 = vector.shape_cast %229 : vector<1x256xf32> to vector<1x1x256xf32>
    tpu.vector_store %arg3[%c0_85, %c0_86, %c0_87], %232 {strides = array<i32>} : memref<1x1x256xf32, #tpu.memory_space<vmem>>, vector<1x1x256xf32>,
    return
  }
  func.func @transform_0(%arg0: i32) -> (i32, i32, i32) {
    %c0_i32 = arith.constant 0 : i32
    %c0_i32_0 = arith.constant 0 : i32
    %c0_i32_1 = arith.constant 0 : i32
    return %arg0, %c0_i32, %c0_i32_0 : i32, i32, i32
  }
  func.func @transform_1(%arg0: i32) -> (i32, i32) {
    %c0_i32 = arith.constant 0 : i32
    %c0_i32_0 = arith.constant 0 : i32
    %c0_i32_1 = arith.constant 0 : i32
    return %c0_i32, %c0_i32_0 : i32, i32
  }
  func.func @transform_2(%arg0: i32) -> (i32, i32, i32) {
    %c0_i32 = arith.constant 0 : i32
    %c0_i32_0 = arith.constant 0 : i32
    %c0_i32_1 = arith.constant 0 : i32
    return %arg0, %c0_i32, %c0_i32_0 : i32, i32, i32
  }
}

</mosaic_0001>

<llo_original>
// kernel: tpu_custom_call.1
$region0: #{tpu_custom_call.1}
  #allocation0 [shape = 'u32[]', space=smem, size = 0x4, offset = 0x4, fixed_abs, tag = 'smem constant byte address 0x4 - core index']
  #allocation1 [shape = 'u32[72,128]{1,0:T(1,128)}', space=vmem, size = 0x9000, scoped, tag = 'internal scratch']
  #allocation2 [shape = 'f32[2,262]{1,0:T(2,128)}', space=vmem, size = 0xc00, scoped, tag = 'scratch operand']
  #allocation3 [shape = 'f32[7,352]{1,0:T(8,128)}', space=vmem, size = 0x3000, scoped, tag = 'scratch operand']
  %s0 = inlined_call_operand.hbm [shape: f32[2,4,256], index: 0, kind: input, shape index: {}]
  %s1 = inlined_call_operand.hbm [shape: f32[7,14], index: 1, kind: input, shape index: {}]
  %s2 = inlined_call_operand.hbm [shape: f32[2,1,256], index: 2, kind: output, shape index: {}]
  %s3 = sld [smem:[#allocation0]]
  $region49: #{tpu_custom_call.1} parent=0
    _
  %s5 = ssub.s32 1, %s3
  %s6 = scalar_select 0, %s5, %s3
  $region1: #{tpu_custom_call.1} parent=0
    #allocation4 [shape = 'u8[8192]{0}', space=vmem, size = 0x2000, scoped, tag = 'input window, operand 0']
    #allocation5 [shape = 's32[2]{0}', space=sflag, size = 0x8, scoped, tag = 'scoped memory for tpu_custom_call.1']
    #allocation6 [shape = 's32[2]{0}', space=sflag, size = 0x8, scoped, tag = 'scoped memory for tpu_custom_call.1']
    #allocation7 [shape = 'u8[4096]{0}', space=vmem, size = 0x1000, scoped, tag = 'input window, operand 1, single buffered']
    #allocation8 [shape = 's32[1]{0}', space=sflag, size = 0x4, scoped, tag = 'scoped memory for tpu_custom_call.1']
    #allocation9 [shape = 'u8[2048]{0}', space=vmem, size = 0x800, scoped, tag = 'output window, operand 0']
    %7 = vsyncpa [#allocation5], 0
    %s8 = scalar_lea.sflag [#allocation5], 1
    %9 = vsyncpa %s8, 0
    %10 = vsyncpa [#allocation8], 0
    %11 = vsyncpa [#allocation6], 0
    %s12 = scalar_lea.sflag [#allocation6], 1
    %13 = vsyncpa %s12, 0
    loop: start=0, step=1, limit=4
    $region2: #{tpu_custom_call.1} parent=1 // loop_pre_header
      _
    $region3: #{tpu_custom_call.1} parent=1 // loop_header
      %s15 = sphi 0, %s19
      %p16 = scmp.ge.s32.totalorder %s15, 4
      %s25 = sphi 0, %s27
      %s28 = sphi 0, %s25
      %s29 = sphi 0, %s28
      %s45 = sphi 0, %s29
      %s49 = sphi 0, %s49
      %s51 = sphi 0, %s49
      %s52 = sphi 0, %s51
      %s66 = sphi 0, %s52
      %s72 = sphi 0, %s74
      %s75 = sphi 0, %s72
      %s76 = sphi 0, %s75
      %s92 = sphi 0, %s76
    $region4: #{tpu_custom_call.1} parent=1 // loop_header_branch
      %18 = sbr.rel (%p16) target = $region8
    $region5: #{tpu_custom_call.1} parent=1 // loop_body
      %s20 = ssub.s32 %s15, 1
      %s21 = ssub.s32 %s15, 2
      %s22 = sadd.s32 %s15, 1
      %s23 = ssub.s32 %s15, %s22
      %p24 = scmp.eq.s32.totalorder %s23, 0
      %s26 = sadd.s32 %s25, 1
      %s27 = scalar_select %p24, %s25, %s26
      %p30 = pneg %p24
      %p31 = scmp.eq.s32.totalorder %s15, 1
      %p32 = por %p30, %p31
      %p33 = scmp.ne.s32.totalorder %s25, %s28
      %p34 = scmp.eq.s32.totalorder %s15, 0
      %p35 = por %p33, %p34
      %p36 = scmp.ne.s32.totalorder %s25, %s28
      %p37 = scmp.eq.s32.totalorder %s20, 1
      %p38 = por %p36, %p37
      %p39 = scmp.ne.s32.totalorder %s28, %s29
      %p40 = scmp.eq.s32.totalorder %s20, 0
      %p41 = por %p39, %p40
      %p42 = scmp.ne.s32.totalorder %s28, %s29
      %p43 = scmp.eq.s32.totalorder %s21, 1
      %p44 = por %p42, %p43
      %p46 = scmp.ne.s32.totalorder %s29, %s45
      %p47 = scmp.eq.s32.totalorder %s21, 0
      %p48 = por %p46, %p47
      %s50 = sadd.s32 %s49, 1
      %p53 = scmp.eq.s32.totalorder %s15, 1
      %p54 = scmp.ne.s32.totalorder %s49, %s51
      %p55 = scmp.eq.s32.totalorder %s15, 0
      %p56 = por %p54, %p55
      %p57 = scmp.ne.s32.totalorder %s49, %s51
      %p58 = scmp.eq.s32.totalorder %s20, 1
      %p59 = por %p57, %p58
      %p60 = scmp.ne.s32.totalorder %s51, %s52
      %p61 = scmp.eq.s32.totalorder %s20, 0
      %p62 = por %p60, %p61
      %p63 = scmp.ne.s32.totalorder %s51, %s52
      %p64 = scmp.eq.s32.totalorder %s21, 1
      %p65 = por %p63, %p64
      %p67 = scmp.ne.s32.totalorder %s52, %s66
      %p68 = scmp.eq.s32.totalorder %s21, 0
      %p69 = por %p67, %p68
      %s70 = ssub.s32 %s15, %s22
      %p71 = scmp.eq.s32.totalorder %s70, 0
      %s73 = sadd.s32 %s72, 1
      %s74 = scalar_select %p71, %s72, %s73
      %p77 = pneg %p71
      %p78 = scmp.eq.s32.totalorder %s15, 1
      %p79 = por %p77, %p78
      %p80 = scmp.ne.s32.totalorder %s72, %s75
      %p81 = scmp.eq.s32.totalorder %s15, 0
      %p82 = por %p80, %p81
      %p83 = scmp.ne.s32.totalorder %s72, %s75
      %p84 = scmp.eq.s32.totalorder %s20, 1
      %p85 = por %p83, %p84
      %p86 = scmp.ne.s32.totalorder %s75, %s76
      %p87 = scmp.eq.s32.totalorder %s20, 0
      %p88 = por %p86, %p87
      %p89 = scmp.ne.s32.totalorder %s75, %s76
      %p90 = scmp.eq.s32.totalorder %s21, 1
      %p91 = por %p89, %p90
      %p93 = scmp.ne.s32.totalorder %s76, %s92
      %p94 = scmp.eq.s32.totalorder %s21, 0
      %p95 = por %p93, %p94
      %p96 = scmp.le.s32.totalorder 1, %s15
      %p97 = scmp.lt.s32.totalorder %s15, 3
      %p98 = pnand %p96, %p97
      %p99 = pneg %p98
      // Predicated region
      $region9: #{tpu_custom_call.1} parent=5 // pred_check
        _
      $region10: #{tpu_custom_call.1} parent=5 // pred_check_branch
        %101 = sbr.rel (%p98) target = $region12
      $region11: #{tpu_custom_call.1} parent=5 // pred_region
        %s102 = ssub.s32 %s15, 1
        // Predicated region
        $region13: #{tpu_custom_call.1} parent=11 // pred_check
          %p103 = pneg %p62
        $region14: #{tpu_custom_call.1} parent=11 // pred_check_branch
          %105 = sbr.rel (%p103) target = $region16
        $region15: #{tpu_custom_call.1} parent=11 // pred_region
          %107 = vsyncadd [#allocation8], 0
          %s109 = sshll.u32 %s1, 4
          %s110 = int_to_ptr.hbm [resolvable:$true] %s109
          %s111 = sshll.u32 [#allocation7], 4
          %s112 = int_to_ptr.vmem [resolvable:$true] %s111
          %114 = dma.hbm_to_vmem [thread:$0]  %s110, 128, %s112, [#allocation8]
        $region16: #{tpu_custom_call.1} parent=11 // pred_fallthru
          _
      $region12: #{tpu_custom_call.1} parent=5 // pred_fallthru
        _
      %p115 = scmp.lt.s32.totalorder %s15, 2
      // Predicated region
      $region17: #{tpu_custom_call.1} parent=5 // pred_check
        %p116 = pneg %p115
      $region18: #{tpu_custom_call.1} parent=5 // pred_check_branch
        %118 = sbr.rel (%p116) target = $region20
      $region19: #{tpu_custom_call.1} parent=5 // pred_region
        // Predicated region
        $region21: #{tpu_custom_call.1} parent=19 // pred_check
          %p119 = pneg %p35
        $region22: #{tpu_custom_call.1} parent=19 // pred_check_branch
          %121 = sbr.rel (%p119) target = $region24
        $region23: #{tpu_custom_call.1} parent=19 // pred_region
          %s122 = sand.u32 %s25, 1
          %s123 = scalar_lea.sflag [#allocation5], %s122
          %s124 = sand.u32 %s25, 1
          %s125 = smul.addr %s124, 8
          %s126 = scalar_lea.vmem [#allocation4], %s125
          %128 = vsyncadd %s123, 0
          %s129 = smul.addr %s15, 2
          %s130 = smul.addr %s129, 4
          %s131 = scalar_lea.hbm %s0, %s130
          %s133 = sshll.u32 %s131, 4
          %s134 = int_to_ptr.hbm [resolvable:$true] %s133
          %s135 = sshll.u32 %s126, 4
          %s136 = int_to_ptr.vmem [resolvable:$true] %s135
          %138 = dma.hbm_to_vmem [thread:$0]  %s134, 128, %s136, %s123
        $region24: #{tpu_custom_call.1} parent=19 // pred_fallthru
          _
      $region20: #{tpu_custom_call.1} parent=5 // pred_fallthru
        _
      %p139 = scmp.le.s32.totalorder 1, %s15
      %p140 = scmp.lt.s32.totalorder %s15, 3
      %p141 = pnand %p139, %p140
      %p142 = pneg %p141
      // Predicated region
      $region25: #{tpu_custom_call.1} parent=5 // pred_check
        _
      $region26: #{tpu_custom_call.1} parent=5 // pred_check_branch
        %144 = sbr.rel (%p141) target = $region28
      $region27: #{tpu_custom_call.1} parent=5 // pred_region
        %s145 = ssub.s32 %s15, 1
        %s146 = sand.u32 %s28, 1
        %s147 = scalar_lea.sflag [#allocation5], %s146
        %s148 = sand.u32 %s28, 1
        %s149 = smul.addr %s148, 8
        %s150 = scalar_lea.vmem [#allocation4], %s149
        // Predicated region
        $region29: #{tpu_custom_call.1} parent=27 // pred_check
          %p151 = pneg %p41
        $region30: #{tpu_custom_call.1} parent=27 // pred_check_branch
          %153 = sbr.rel (%p151) target = $region32
        $region31: #{tpu_custom_call.1} parent=27 // pred_region
          %155 = dma.done %s147, 128
        $region32: #{tpu_custom_call.1} parent=27 // pred_fallthru
          _
        // Predicated region
        $region33: #{tpu_custom_call.1} parent=27 // pred_check
          %p156 = pneg %p62
        $region34: #{tpu_custom_call.1} parent=27 // pred_check_branch
          %158 = sbr.rel (%p156) target = $region36
        $region35: #{tpu_custom_call.1} parent=27 // pred_region
          %160 = dma.done [#allocation8], 128
        $region36: #{tpu_custom_call.1} parent=27 // pred_fallthru
          _
        %s161 = sand.u32 %s28, 1
        %s162 = scalar_lea.sflag [#allocation5], %s161
        %s163 = sand.u32 %s28, 1
        %s164 = smul.addr %s163, 8
        %s165 = scalar_lea.vmem [#allocation4], %s164
        %p166 = pneg %p41
        %p167 = pneg %p38
        %p168 = pneg %p62
        %p169 = pneg %p59
        %p170 = pneg %p88
        %p171 = pneg %p85
        %s172 = sand.u32 %s75, 1
        %s173 = scalar_lea.sflag [#allocation6], %s172
        %s174 = sand.u32 %s75, 1
        %s175 = smul.addr %s174, 2
        %s176 = scalar_lea.vmem [#allocation9], %s175
        %v177 = vld [vmem:[%s150] sm:$0xff]
        %179 = vst [vmem:[#allocation1] ss:$2 sm:$0xff] %v177
        %v180 = vld.sshfl [vmem:[#allocation1] sm:$0xff pattern:$0x75316420]
        %v181 = vld.sshfl [vmem:[#allocation1 + $0x8] sm:$0xff pattern:$0x75316420]
        %vm184 = vcmask 1043456
        %v185 = vsel %vm184, %v180, 0.0
        %v186 = vrot.slane %v185, 4
        %v187 = vadd.f32 %v185, %v186
        %v188 = vrot.slane %v187, 2
        %v189 = vadd.f32 %v187, %v188
        %v190 = vrot.slane %v189, 1
        %v191 = vadd.f32 %v189, %v190
        %v192 = vsel %vm184, %v181, 0.0
        %v193 = vrot.slane %v192, 4
        %v194 = vadd.f32 %v192, %v193
        %v195 = vrot.slane %v194, 2
        %v196 = vadd.f32 %v194, %v195
        %v197 = vrot.slane %v196, 1
        %v198 = vadd.f32 %v196, %v197
        %v199 = vrcp.pop 4.0
        %v200 = vmul.f32 4.0, %v199
        %v201 = vsub.f32 1.0, %v200
        %v202 = vmul.f32 %v199, %v201
        %v203 = vadd.f32 %v199, %v202
        %vm204 = vweird.f32 %v199
        %v205 = vsel %vm204, %v199, %v203
        %v206 = vmul.f32 %v191, %v205
        %v207 = vmul.f32 %v198, %v205
        %208 = vst [vmem:[#allocation1] ss:$2 sm:$0xff] %v177
        %v209 = vld.sshfl [vmem:[#allocation1] sm:$0xff pattern:$0x75316420]
        %v210 = vld.sshfl [vmem:[#allocation1 + $0x8] sm:$0xff pattern:$0x75316420]
        %v213 = vsel %vm184, %v209, -inf
        %v214 = vrot.slane %v213, 4
        %v215 = vmax.f32 %v213, %v214
        %v216 = vrot.slane %v215, 2
        %v217 = vmax.f32 %v215, %v216
        %v218 = vrot.slane %v217, 1
        %v219 = vmax.f32 %v217, %v218
        %v220 = vsel %vm184, %v210, -inf
        %v221 = vrot.slane %v220, 4
        %v222 = vmax.f32 %v220, %v221
        %v223 = vrot.slane %v222, 2
        %v224 = vmax.f32 %v222, %v223
        %v225 = vrot.slane %v224, 1
        %v226 = vmax.f32 %v224, %v225
        %vm227 = vcmask 17408
        %228 = vst.msk [vmem:[#allocation2] sm:$0x3] %vm227, 0.0
        %vm229 = vcmask 42008
        %230 = vst.msk [vmem:[#allocation2 + $0x4] sm:$0x3] %vm229, 0.0
        %v233 = vrot.slane %v207, 7
        %vm234 = vcmask 1040384
        %v235 = vsel %vm234, %v206, %v233
        %236 = vrot.lane.b32.xlu0 %v235, 3
        %v237 = vpop.permute.xlu0 %236
        %v238 = vrot.slane %v237, 7
        %vm239 = vcmask 23552
        %v240 = vsel %vm239, %v238, %v237
        %v242 = vlaneseq
        %vm243 = vcmp.ge.s32.totalorder %v242, 3
        %vm244 = vcmp.lt.s32.totalorder %v242, 259
        %vm245 = vmand %vm243, %vm244
        %246 = vst.msk [vmem:[#allocation2] ss:$2 sm:$0x7] %vm245, %v240
        %v249 = vrot.slane %v226, 7
        %v250 = vsel %vm234, %v219, %v249
        %251 = vrot.lane.b32.xlu0 %v250, 3
        %v252 = vpop.permute.xlu0 %251
        %v253 = vrot.slane %v252, 7
        %v254 = vsel %vm239, %v253, %v252
        %s256 = scalar_lea.vmem [#allocation2], 1
        %257 = vst.msk [vmem:[%s256] ss:$2 sm:$0x7] %vm245, %v254
        %v258 = vlaneseq
        %v259 = vand.u32 %v258, 127
        %v260 = vadd.s32 %v259, 128
        %vm261 = vcmp.lt.s32.totalorder %v259, 0
        %v262 = vsub.s32 0, %v259
        %v263 = vsel %vm261, %v262, %v259
        %v264 = vshrl.u32 %v263, 4
        %v265 = vand.u32 %v263, 15
        %v266 = vsub.s32 0, %v265
        %v267 = vsel %vm261, %v266, %v265
        %vm268 = vcmp.lt.s32.totalorder %v260, 0
        %v269 = vsub.s32 0, %v260
        %v270 = vsel %vm268, %v269, %v260
        %v271 = vshrl.u32 %v270, 4
        %v272 = vand.u32 %v270, 15
        %v273 = vsub.s32 0, %v272
        %v274 = vsel %vm268, %v273, %v272
        %vm275 = vcmp.ne.s32.totalorder %v267, 0
        %vm276 = vcmp.ne.s32.totalorder %v274, 0
        %vm277 = vcmp.lt.s32.totalorder %v267, 0
        %vm278 = vcmp.lt.s32.totalorder %v274, 0
        %vm279 = vmand %vm277, %vm275
        %vm280 = vmand %vm278, %vm276
        %v281 = vadd.s32 %v267, 16
        %v282 = vadd.s32 %v274, 16
        %v283 = vsel %vm279, %v281, %v267
        %v284 = vsel %vm280, %v282, %v274
        %v285 = vld [vmem:[#allocation7] sm:$0x7f]
        %v286 = vld [vmem:[#allocation2] ss:$2 sm:$0x3]
        %vm287 = vcmp.ge.s32.totalorder %v283, 3
        %vm288 = vcmp.ge.s32.totalorder %v284, 3
        %vm289 = vcmp.lt.s32.totalorder %v283, 19
        %vm290 = vcmp.lt.s32.totalorder %v284, 19
        %vm291 = vmand %vm287, %vm289
        %vm292 = vmand %vm288, %vm290
        %v294 = vperm.slane %v286, 0
        %v295 = vperm.slane %v286, 1
        %v298 = vsel %vm291, %v294, 0.0
        %v299 = vsel %vm292, %v295, 0.0
        %301 = vset.pattern.permute.xlu0 0
        %302 = vperm.xlu0 %301, %v285
        %v303 = vpop.permute.xlu0 %302
        %v305 = vperm.slane %v298, 0
        %v306 = vperm.slane %v299, 0
        %v307 = vmul.f32 %v303, %v305
        %v308 = vmul.f32 %v303, %v306
        %v309 = vadd.f32 %v307, 0.0
        %v310 = vadd.f32 %v308, 0.0
        %v311 = vld [vmem:[#allocation2] ss:$2 sm:$0x7]
        %vm312 = vcmp.ge.s32.totalorder %v283, 2
        %vm313 = vcmp.ge.s32.totalorder %v284, 2
        %vm314 = vcmp.lt.s32.totalorder %v283, 18
        %vm315 = vcmp.lt.s32.totalorder %v284, 18
        %vm316 = vmand %vm312, %vm314
        %vm317 = vmand %vm313, %vm315
        %v319 = vperm.slane %v311, 0
        %v320 = vperm.slane %v311, 1
        %v321 = vperm.slane %v311, 2
        %322 = vrot.lane.b32.xlu0 %v319, 127
        %v323 = vpop.permute.xlu0 %322
        %324 = vrot.lane.b32.xlu0 %v320, 127
        %v325 = vpop.permute.xlu0 %324
        %326 = vrot.lane.b32.xlu0 %v321, 127
        %v327 = vpop.permute.xlu0 %326
        %vm328 = vcmask 1039360
        %v329 = vsel %vm328, %v323, %v325
        %v330 = vsel %vm328, %v325, %v327
        %v333 = vsel %vm316, %v329, 0.0
        %v334 = vsel %vm317, %v330, 0.0
        %335 = vset.pattern.permute.xlu0 1
        %336 = vperm.xlu0 %335, %v285
        %v337 = vpop.permute.xlu0 %336
        %v339 = vperm.slane %v333, 0
        %v340 = vperm.slane %v334, 0
        %v341 = vmul.f32 %v337, %v339
        %v342 = vmul.f32 %v337, %v340
        %v343 = vadd.f32 %v341, 0.0
        %v344 = vadd.f32 %v342, 0.0
        %vm345 = vcmp.ge.s32.totalorder %v283, 1
        %vm346 = vcmp.ge.s32.totalorder %v284, 1
        %vm347 = vcmp.lt.s32.totalorder %v283, 17
        %vm348 = vcmp.lt.s32.totalorder %v284, 17
        %vm349 = vmand %vm345, %vm347
        %vm350 = vmand %vm346, %vm348
        %351 = vrot.lane.b32.xlu0 %v319, 126
        %v352 = vpop.permute.xlu0 %351
        %353 = vrot.lane.b32.xlu0 %v320, 126
        %v354 = vpop.permute.xlu0 %353
        %355 = vrot.lane.b32.xlu0 %v321, 126
        %v356 = vpop.permute.xlu0 %355
        %vm357 = vcmask 1031168
        %v358 = vsel %vm357, %v352, %v354
        %v359 = vsel %vm357, %v354, %v356
        %v362 = vsel %vm349, %v358, 0.0
        %v363 = vsel %vm350, %v359, 0.0
        %364 = vset.pattern.permute.xlu0 2
        %365 = vperm.xlu0 %364, %v285
        %v366 = vpop.permute.xlu0 %365
        %v368 = vperm.slane %v362, 0
        %v369 = vperm.slane %v363, 0
        %v370 = vmul.f32 %v366, %v368
        %v371 = vmul.f32 %v366, %v369
        %v372 = vadd.f32 %v370, 0.0
        %v373 = vadd.f32 %v371, 0.0
        %374 = vset.pattern.permute.xlu0 3
        %375 = vperm.xlu0 %374, %v285
        %v376 = vpop.permute.xlu0 %375
        %v381 = vmul.f32 %v376, %v319
        %v382 = vmul.f32 %v376, %v320
        %v383 = vmul.f32 %v376, %v321
        %v384 = vadd.f32 %v381, 0.0
        %v385 = vadd.f32 %v382, 0.0
        %v386 = vadd.f32 %v383, 0.0
        %vm387 = vcmp.ge.s32.totalorder %v283, 4294967295
        %vm388 = vcmp.ge.s32.totalorder %v284, 4294967295
        %vm389 = vcmp.lt.s32.totalorder %v283, 15
        %vm390 = vcmp.lt.s32.totalorder %v284, 15
        %vm391 = vmand %vm387, %vm389
        %vm392 = vmand %vm388, %vm390
        %393 = vrot.lane.b32.xlu0 %v319, 124
        %v394 = vpop.permute.xlu0 %393
        %395 = vrot.lane.b32.xlu0 %v320, 124
        %v396 = vpop.permute.xlu0 %395
        %397 = vrot.lane.b32.xlu0 %v321, 124
        %v398 = vpop.permute.xlu0 %397
        %vm399 = vcmask 1014784
        %v400 = vsel %vm399, %v394, %v396
        %v401 = vsel %vm399, %v396, %v398
        %v404 = vsel %vm391, %v400, 0.0
        %v405 = vsel %vm392, %v401, 0.0
        %406 = vset.pattern.permute.xlu0 4
        %407 = vperm.xlu0 %406, %v285
        %v408 = vpop.permute.xlu0 %407
        %v410 = vperm.slane %v404, 0
        %v411 = vperm.slane %v405, 0
        %v412 = vmul.f32 %v408, %v410
        %v413 = vmul.f32 %v408, %v411
        %v414 = vadd.f32 %v309, %v412
        %v415 = vadd.f32 %v310, %v413
        %vm416 = vcmp.ge.s32.totalorder %v283, 4294967294
        %vm417 = vcmp.ge.s32.totalorder %v284, 4294967294
        %vm418 = vcmp.lt.s32.totalorder %v283, 14
        %vm419 = vcmp.lt.s32.totalorder %v284, 14
        %vm420 = vmand %vm416, %vm418
        %vm421 = vmand %vm417, %vm419
        %422 = vrot.lane.b32.xlu0 %v319, 123
        %v423 = vpop.permute.xlu0 %422
        %424 = vrot.lane.b32.xlu0 %v320, 123
        %v425 = vpop.permute.xlu0 %424
        %426 = vrot.lane.b32.xlu0 %v321, 123
        %v427 = vpop.permute.xlu0 %426
        %vm428 = vcmask 1006592
        %v429 = vsel %vm428, %v423, %v425
        %v430 = vsel %vm428, %v425, %v427
        %v433 = vsel %vm420, %v429, 0.0
        %v434 = vsel %vm421, %v430, 0.0
        %435 = vset.pattern.permute.xlu0 5
        %436 = vperm.xlu0 %435, %v285
        %v437 = vpop.permute.xlu0 %436
        %v439 = vperm.slane %v433, 0
        %v440 = vperm.slane %v434, 0
        %v441 = vmul.f32 %v437, %v439
        %v442 = vmul.f32 %v437, %v440
        %v443 = vadd.f32 %v343, %v441
        %v444 = vadd.f32 %v344, %v442
        %vm445 = vcmp.ge.s32.totalorder %v283, 4294967293
        %vm446 = vcmp.ge.s32.totalorder %v284, 4294967293
        %vm447 = vcmp.lt.s32.totalorder %v283, 13
        %vm448 = vcmp.lt.s32.totalorder %v284, 13
        %vm449 = vmand %vm445, %vm447
        %vm450 = vmand %vm446, %vm448
        %451 = vrot.lane.b32.xlu0 %v319, 122
        %v452 = vpop.permute.xlu0 %451
        %453 = vrot.lane.b32.xlu0 %v320, 122
        %v454 = vpop.permute.xlu0 %453
        %455 = vrot.lane.b32.xlu0 %v321, 122
        %v456 = vpop.permute.xlu0 %455
        %vm457 = vcmask 998400
        %v458 = vsel %vm457, %v452, %v454
        %v459 = vsel %vm457, %v454, %v456
        %v462 = vsel %vm449, %v458, 0.0
        %v463 = vsel %vm450, %v459, 0.0
        %464 = vset.pattern.permute.xlu0 6
        %465 = vperm.xlu0 %464, %v285
        %v466 = vpop.permute.xlu0 %465
        %v468 = vperm.slane %v462, 0
        %v469 = vperm.slane %v463, 0
        %v470 = vmul.f32 %v466, %v468
        %v471 = vmul.f32 %v466, %v469
        %v472 = vadd.f32 %v372, %v470
        %v473 = vadd.f32 %v373, %v471
        %v474 = vld [vmem:[%s256] ss:$2 sm:$0x3]
        %v476 = vperm.slane %v474, 0
        %v477 = vperm.slane %v474, 1
        %v480 = vsel %vm291, %v476, 0.0
        %v481 = vsel %vm292, %v477, 0.0
        %482 = vset.pattern.permute.xlu0 7
        %483 = vperm.xlu0 %482, %v285
        %v484 = vpop.permute.xlu0 %483
        %v486 = vperm.slane %v480, 0
        %v487 = vperm.slane %v481, 0
        %v488 = vmul.f32 %v484, %v486
        %v489 = vmul.f32 %v484, %v487
        %492 = vrot.lane.b32.xlu0 %v488, 3
        %v493 = vpop.permute.xlu0 %492
        %494 = vrot.lane.b32.xlu0 %v489, 3
        %v495 = vpop.permute.xlu0 %494
        %v496 = vsel %vm239, %v493, %v495
        %v500 = vadd.f32 %v384, %v493
        %v501 = vadd.f32 %v385, %v496
        %v502 = vadd.f32 %v386, %v495
        %v503 = vld [vmem:[%s256] ss:$2 sm:$0x7]
        %v505 = vperm.slane %v503, 0
        %v506 = vperm.slane %v503, 1
        %v507 = vperm.slane %v503, 2
        %508 = vrot.lane.b32.xlu0 %v505, 127
        %v509 = vpop.permute.xlu0 %508
        %510 = vrot.lane.b32.xlu0 %v506, 127
        %v511 = vpop.permute.xlu0 %510
        %512 = vrot.lane.b32.xlu0 %v507, 127
        %v513 = vpop.permute.xlu0 %512
        %v514 = vsel %vm328, %v509, %v511
        %v515 = vsel %vm328, %v511, %v513
        %v518 = vsel %vm316, %v514, 0.0
        %v519 = vsel %vm317, %v515, 0.0
        %520 = vset.pattern.permute.xlu0 8
        %521 = vperm.xlu0 %520, %v285
        %v522 = vpop.permute.xlu0 %521
        %v524 = vperm.slane %v518, 0
        %v525 = vperm.slane %v519, 0
        %v526 = vmul.f32 %v522, %v524
        %v527 = vmul.f32 %v522, %v525
        %v528 = vadd.f32 %v414, %v526
        %v529 = vadd.f32 %v415, %v527
        %530 = vrot.lane.b32.xlu0 %v505, 126
        %v531 = vpop.permute.xlu0 %530
        %532 = vrot.lane.b32.xlu0 %v506, 126
        %v533 = vpop.permute.xlu0 %532
        %534 = vrot.lane.b32.xlu0 %v507, 126
        %v535 = vpop.permute.xlu0 %534
        %v536 = vsel %vm357, %v531, %v533
        %v537 = vsel %vm357, %v533, %v535
        %v540 = vsel %vm349, %v536, 0.0
        %v541 = vsel %vm350, %v537, 0.0
        %542 = vset.pattern.permute.xlu0 9
        %543 = vperm.xlu0 %542, %v285
        %v544 = vpop.permute.xlu0 %543
        %v546 = vperm.slane %v540, 0
        %v547 = vperm.slane %v541, 0
        %v548 = vmul.f32 %v544, %v546
        %v549 = vmul.f32 %v544, %v547
        %v550 = vadd.f32 %v443, %v548
        %v551 = vadd.f32 %v444, %v549
        %552 = vset.pattern.permute.xlu0 10
        %553 = vperm.xlu0 %552, %v285
        %v554 = vpop.permute.xlu0 %553
        %v559 = vmul.f32 %v554, %v505
        %v560 = vmul.f32 %v554, %v506
        %v561 = vmul.f32 %v554, %v507
        %565 = vrot.lane.b32.xlu0 %v559, 125
        %v566 = vpop.permute.xlu0 %565
        %567 = vrot.lane.b32.xlu0 %v560, 125
        %v568 = vpop.permute.xlu0 %567
        %569 = vrot.lane.b32.xlu0 %v561, 125
        %v570 = vpop.permute.xlu0 %569
        %vm571 = vcmask 1022976
        %v572 = vsel %vm571, %v566, %v568
        %v573 = vsel %vm571, %v568, %v570
        %v576 = vadd.f32 %v472, %v572
        %v577 = vadd.f32 %v473, %v573
        %578 = vrot.lane.b32.xlu0 %v505, 124
        %v579 = vpop.permute.xlu0 %578
        %580 = vrot.lane.b32.xlu0 %v506, 124
        %v581 = vpop.permute.xlu0 %580
        %582 = vrot.lane.b32.xlu0 %v507, 124
        %v583 = vpop.permute.xlu0 %582
        %v584 = vsel %vm399, %v579, %v581
        %v585 = vsel %vm399, %v581, %v583
        %v588 = vsel %vm391, %v584, 0.0
        %v589 = vsel %vm392, %v585, 0.0
        %590 = vset.pattern.permute.xlu0 11
        %591 = vperm.xlu0 %590, %v285
        %v592 = vpop.permute.xlu0 %591
        %v594 = vperm.slane %v588, 0
        %v595 = vperm.slane %v589, 0
        %v596 = vmul.f32 %v592, %v594
        %v597 = vmul.f32 %v592, %v595
        %600 = vrot.lane.b32.xlu0 %v596, 3
        %v601 = vpop.permute.xlu0 %600
        %602 = vrot.lane.b32.xlu0 %v597, 3
        %v603 = vpop.permute.xlu0 %602
        %v604 = vsel %vm239, %v601, %v603
        %v608 = vadd.f32 %v500, %v601
        %v609 = vadd.f32 %v501, %v604
        %v610 = vadd.f32 %v502, %v603
        %611 = vrot.lane.b32.xlu0 %v505, 123
        %v612 = vpop.permute.xlu0 %611
        %613 = vrot.lane.b32.xlu0 %v506, 123
        %v614 = vpop.permute.xlu0 %613
        %615 = vrot.lane.b32.xlu0 %v507, 123
        %v616 = vpop.permute.xlu0 %615
        %v617 = vsel %vm428, %v612, %v614
        %v618 = vsel %vm428, %v614, %v616
        %v621 = vsel %vm420, %v617, 0.0
        %v622 = vsel %vm421, %v618, 0.0
        %623 = vset.pattern.permute.xlu0 12
        %624 = vperm.xlu0 %623, %v285
        %v625 = vpop.permute.xlu0 %624
        %v627 = vperm.slane %v621, 0
        %v628 = vperm.slane %v622, 0
        %v629 = vmul.f32 %v625, %v627
        %v630 = vmul.f32 %v625, %v628
        %v631 = vadd.f32 %v528, %v629
        %v632 = vadd.f32 %v529, %v630
        %633 = vrot.lane.b32.xlu0 %v505, 122
        %v634 = vpop.permute.xlu0 %633
        %635 = vrot.lane.b32.xlu0 %v506, 122
        %v636 = vpop.permute.xlu0 %635
        %637 = vrot.lane.b32.xlu0 %v507, 122
        %v638 = vpop.permute.xlu0 %637
        %v639 = vsel %vm457, %v634, %v636
        %v640 = vsel %vm457, %v636, %v638
        %v643 = vsel %vm449, %v639, 0.0
        %v644 = vsel %vm450, %v640, 0.0
        %645 = vset.pattern.permute.xlu0 13
        %646 = vperm.xlu0 %645, %v285
        %v647 = vpop.permute.xlu0 %646
        %v649 = vperm.slane %v643, 0
        %v650 = vperm.slane %v644, 0
        %v651 = vmul.f32 %v647, %v649
        %v652 = vmul.f32 %v647, %v650
        %v653 = vadd.f32 %v550, %v651
        %v654 = vadd.f32 %v551, %v652
        %v655 = vadd.f32 %v631, %v653
        %v656 = vadd.f32 %v632, %v654
        %660 = vrot.lane.b32.xlu0 %v608, 125
        %v661 = vpop.permute.xlu0 %660
        %662 = vrot.lane.b32.xlu0 %v609, 125
        %v663 = vpop.permute.xlu0 %662
        %664 = vrot.lane.b32.xlu0 %v610, 125
        %v665 = vpop.permute.xlu0 %664
        %v666 = vsel %vm571, %v661, %v663
        %v667 = vsel %vm571, %v663, %v665
        %v670 = vadd.f32 %v576, %v666
        %v671 = vadd.f32 %v577, %v667
        %v672 = vadd.f32 %v655, %v670
        %v673 = vadd.f32 %v656, %v671
        %vm674 = vcmask 391168
        %675 = vst.msk [vmem:[#allocation3] sm:$0x7f] %vm674, 0.0
        %vm676 = vcmask 784768
        %677 = vst.msk [vmem:[#allocation3 + $0x10] sm:$0x7f] %vm676, 0.0
        %680 = vrot.lane.b32.xlu0 %v672, 48
        %v681 = vpop.permute.xlu0 %680
        %682 = vrot.lane.b32.xlu0 %v673, 48
        %v683 = vpop.permute.xlu0 %682
        %vm684 = vcmask 392192
        %v685 = vsel %vm684, %v681, %v683
        %vm689 = vcmask 1046912
        %690 = vst.msk [vmem:[#allocation3] sm:$0x7f] %vm689, %v681
        %691 = vst [vmem:[#allocation3 + $0x8] sm:$0x7f] %v685
        %692 = vst.msk [vmem:[#allocation3 + $0x10] sm:$0x7f] %vm674, %v683
        %v693 = vld [vmem:[#allocation3] ss:$8 sm:$0x3]
        %s694 = scalar_lea.vmem [#allocation3], 1
        %v695 = vld [vmem:[%s694] ss:$8 sm:$0x7]
        %s696 = scalar_lea.vmem [#allocation3], 2
        %v697 = vld [vmem:[%s696] ss:$8 sm:$0x7]
        %s698 = scalar_lea.vmem [#allocation3], 3
        %v699 = vld [vmem:[%s698] ss:$8 sm:$0x7]
        %s700 = scalar_lea.vmem [#allocation3], 4
        %v701 = vld [vmem:[%s700] ss:$8 sm:$0x7]
        %s702 = scalar_lea.vmem [#allocation3], 5
        %v703 = vld [vmem:[%s702] ss:$8 sm:$0x7]
        %s704 = scalar_lea.vmem [#allocation3], 6
        %v705 = vld [vmem:[%s704] ss:$8 sm:$0x7]
        %707 = vrot.lane.b32.xlu0 %v695, 112
        %v708 = vpop.permute.xlu0 %707
        %v709 = vrot.slane %v708, 1
        %vm710 = vcmask 916480
        %v711 = vsel %vm710, %v708, %v709
        %v713 = vadd.f32 %v693, %v711
        %715 = vrot.lane.b32.xlu0 %v699, 112
        %v716 = vpop.permute.xlu0 %715
        %v717 = vrot.slane %v716, 1
        %v718 = vsel %vm710, %v716, %v717
        %v720 = vadd.f32 %v697, %v718
        %722 = vrot.lane.b32.xlu0 %v703, 112
        %v723 = vpop.permute.xlu0 %722
        %v724 = vrot.slane %v723, 1
        %v725 = vsel %vm710, %v723, %v724
        %v727 = vadd.f32 %v701, %v725
        %729 = vrot.lane.b32.xlu0 %v720, 96
        %v730 = vpop.permute.xlu0 %729
        %v731 = vrot.slane %v730, 1
        %vm732 = vcmask 785408
        %v733 = vsel %vm732, %v730, %v731
        %v735 = vadd.f32 %v713, %v733
        %737 = vrot.lane.b32.xlu0 %v705, 96
        %v738 = vpop.permute.xlu0 %737
        %v739 = vrot.slane %v738, 1
        %v740 = vsel %vm732, %v738, %v739
        %v742 = vadd.f32 %v727, %v740
        %744 = vrot.lane.b32.xlu0 %v742, 64
        %v745 = vpop.permute.xlu0 %744
        %v746 = vrot.slane %v745, 1
        %vm747 = vcmask 523264
        %v748 = vsel %vm747, %v745, %v746
        %v750 = vadd.f32 %v735, %v748
        %v751 = vxor.u32 %v750, 2147483648
        %v752 = vmul.f32 %v751, 1.442695
        %v753 = vpow.pop %v752
        %v754 = vadd.f32 %v753, 1.0
        %v755 = vrcp.pop %v754
        %v756 = vmul.f32 %v754, %v755
        %v757 = vsub.f32 1.0, %v756
        %v758 = vmul.f32 %v755, %v757
        %v759 = vadd.f32 %v755, %v758
        %vm760 = vweird.f32 %v754
        %vm761 = vweird.f32 %v755
        %vm762 = vmor %vm760, %vm761
        %v763 = vsel %vm762, %v755, %v759
        %v764 = vand.u32 2147483647, %v754
        %vm765 = vcmp.eq.f32.partialorder %v764, 8.507059e+37
        %v766 = vand.u32 %v754, 2147483648
        %v767 = vor.u32 1.1754944e-38, %v766
        %v768 = vsel %vm765, %v767, %v763
        %v769 = vmul.f32 1.0, %v768
        %vm770 = vcmp.ge.s32.totalorder %v242, 0
        %vm771 = vcmp.lt.s32.totalorder %v242, 256
        %vm772 = vmand %vm770, %vm771
        %773 = vst.msk [vmem:[%s176] sm:$0x3] %vm772, %v769
        %s774 = sand.u32 %s75, 1
        %s775 = scalar_lea.sflag [#allocation6], %s774
        %s776 = sand.u32 %s75, 1
        %s777 = smul.addr %s776, 2
        %s778 = scalar_lea.vmem [#allocation9], %s777
        // Predicated region
        $region37: #{tpu_custom_call.1} parent=27 // pred_check
          %p779 = pneg %p85
        $region38: #{tpu_custom_call.1} parent=27 // pred_check_branch
          %781 = sbr.rel (%p779) target = $region40
        $region39: #{tpu_custom_call.1} parent=27 // pred_region
          %783 = vsyncadd %s775, 0
          %s784 = smul.addr %s20, 2
          %s785 = scalar_lea.hbm %s2, %s784
          %s787 = sshll.u32 %s778, 4
          %s788 = int_to_ptr.vmem [resolvable:$true] %s787
          %s789 = sshll.u32 %s785, 4
          %s790 = int_to_ptr.hbm [resolvable:$true] %s789
          %792 = dma.vmem_to_hbm [thread:$0]  %s788, 32, %s790, %s775
        $region40: #{tpu_custom_call.1} parent=27 // pred_fallthru
          _
      $region28: #{tpu_custom_call.1} parent=5 // pred_fallthru
        _
      %p793 = scmp.le.s32.totalorder 2, %s15
      // Predicated region
      $region41: #{tpu_custom_call.1} parent=5 // pred_check
        %p794 = pneg %p793
      $region42: #{tpu_custom_call.1} parent=5 // pred_check_branch
        %796 = sbr.rel (%p794) target = $region44
      $region43: #{tpu_custom_call.1} parent=5 // pred_region
        %s797 = ssub.s32 %s15, 2
        // Predicated region
        $region45: #{tpu_custom_call.1} parent=43 // pred_check
          %p798 = pneg %p91
        $region46: #{tpu_custom_call.1} parent=43 // pred_check_branch
          %800 = sbr.rel (%p798) target = $region48
        $region47: #{tpu_custom_call.1} parent=43 // pred_region
          %s801 = sand.u32 %s76, 1
          %s802 = scalar_lea.sflag [#allocation6], %s801
          %s803 = sand.u32 %s76, 1
          %s804 = smul.addr %s803, 2
          %s805 = scalar_lea.vmem [#allocation9], %s804
          %807 = dma.done %s802, 32
        $region48: #{tpu_custom_call.1} parent=43 // pred_fallthru
          _
      $region44: #{tpu_custom_call.1} parent=5 // pred_fallthru
        _
    $region6: #{tpu_custom_call.1} parent=1 // loop_footer
      %s19 = sadd.s32 1, %s15
    $region7: #{tpu_custom_call.1} parent=1 // loop_footer_branch
      %14 = sbr.rel target = $region3
    $region8: #{tpu_custom_call.1} parent=1 // loop_exit
      _
    %808 = vsyncpa [#allocation5], 1
    %s809 = scalar_lea.sflag [#allocation5], 1
    %810 = vsyncpa %s809, 1
    %811 = vsyncpa [#allocation8], 1
    %812 = vsyncpa [#allocation6], 1
    %s813 = scalar_lea.sflag [#allocation6], 1
    %814 = vsyncpa %s813, 1

</llo_original>
